<compile_context>
chip_gen: v7x
topology: tpu7x:2x2x1
jax: 0.10.0
libtpu: 0.0.40
codegen_flags: <defaults>
</compile_context>

<pallas_src>
import jax
import jax.numpy as jnp
import numpy as np
from jax.experimental import pallas as pl
from jax.experimental.pallas import tpu as pltpu


def _make_tcn_kernel(NB, C_in, C_out, T, V, kt, pad, TVp):
    """Builds the per-grid-step kernel (all shapes static / baked in)."""
    TV = T * V

    def kernel(x_ref, s1_ref, t1_ref, w_ref, b_ref, o_ref):
        # x_ref : (NB, C_in, T*V)    unpadded input block (f32 or bf16)
        # s1_ref: (C_in, 1)          folded BN1 scale (f32)
        # t1_ref: (C_in, 1)          folded BN1 shift (f32)
        # w_ref : (C_out, kt*C_in)   tap-fused conv weight (BN2-scaled), K minor
        # b_ref : (C_out, 1)         conv bias with BN2 folded in (f32)
        # o_ref : (NB, C_out, TVp)   output block, lane-dense (TVp % 128 == 0)

        # BN1 (eval-mode affine) + ReLU once over the whole block, in f32
        # (elementwise stays f32 so the same kernel is v5e-safe even with
        # bf16 MXU operands).
        h = jnp.maximum(
            x_ref[...].astype(jnp.float32) * s1_ref[...][None, :, :]
            + t1_ref[...][None, :, :],
            0.0)                                           # (NB, C_in, TV) f32

        w = w_ref[...]                                     # (C_out, kt*C_in)
        bias = b_ref[...]                                  # (C_out, 1)

        # Per batch element: assemble the im2col operand (kt*C_in, TVp) from
        # kt time-shifted slices of h (true zeros for the temporal halo and
        # the lane padding), do ONE MXU matmul with K = kt*C_in, then the
        # bias + ReLU epilogue and a full-lane store.
        # NB is small & static -> fully unrolled.
        for nb in range(NB):
            hb = h[nb]                                     # (C_in, TV)
            taps = []
            for dt in range(kt):                           # kt small & static
                off = (dt - pad) * V                       # temporal shift (lanes)
                lead = max(0, -off)                        # leading zero cols
                src0 = max(0, off)
                width = min(TV - src0, TVp - lead)
                trail = TVp - lead - width                 # halo + lane-pad zeros
                pieces = []
                if lead:
                    pieces.append(jnp.zeros((C_in, lead), jnp.float32))
                pieces.append(hb[:, src0:src0 + width])
                if trail:
                    pieces.append(jnp.zeros((C_in, trail), jnp.float32))
                taps.append(pieces[0] if len(pieces) == 1
                            else jnp.concatenate(pieces, axis=1))
            h_col = jnp.concatenate(taps, axis=0)          # (kt*C_in, TVp)

            y = jnp.dot(w, h_col.astype(w.dtype),
                        preferred_element_type=jnp.float32)  # (C_out, TVp) f32
            o_ref[nb] = jnp.maximum(y + bias, 0.0).astype(o_ref.dtype)

    return kernel


def tcn_block_forward(x, gamma1, beta1, mean1, var1, conv_w, conv_b,
                      gamma2, beta2, mean2, var2, *, stride=1, eps=1e-5,
                      operand_dtype=jnp.float32, batch_block=8):
    """tcn_block.forward (eval mode, residual=False, dropout=0).

    x: (N, C_in, T, V); conv_w: (C_out, C_in, kt, 1); conv_b: (C_out,);
    BN params are (gamma, beta, running_mean, running_var) per BatchNorm.
    `operand_dtype=jnp.bfloat16` casts the MXU operands (x, fused weight) on
    v6e/v7x; elementwise + accumulation stay f32. Returns (N, C_out, T, V) f32.
    """
    assert stride == 1  # TODO(synk): stride > 1 not ported (module default is 1)
    N, C_in, T, V = x.shape
    C_out, C_in_w, kt, kw = conv_w.shape
    assert C_in_w == C_in and kw == 1 and kt % 2 == 1
    pad = (kt - 1) // 2
    TV = T * V
    TVp = ((TV + 127) // 128) * 128          # lane-dense output width

    # Fold eval-mode BatchNorms into affine params (tiny precompute, XLA-side).
    s1 = gamma1 / jnp.sqrt(var1 + eps)
    t1 = beta1 - mean1 * s1
    s2 = gamma2 / jnp.sqrt(var2 + eps)
    t2 = beta2 - mean2 * s2

    # Tap-fused weight: rows ordered [tap0: c0..c_{Cin-1}, tap1: ..., ...],
    # K = kt*C_in on the minor (lane) dim.
    w_eff = (conv_w[:, :, :, 0] * s2[:, None, None])          # (C_out, C_in, kt)
    w_eff = jnp.transpose(w_eff, (0, 2, 1)).reshape(C_out, kt * C_in)
    w_eff = w_eff.astype(operand_dtype)
    b_eff = (conv_b * s2 + t2).reshape(C_out, 1).astype(jnp.float32)
    s1c = s1.reshape(C_in, 1).astype(jnp.float32)
    t1c = t1.reshape(C_in, 1).astype(jnp.float32)

    # No HBM padding pass: pass x unpadded, flatten (T, V) onto lanes.
    x_flat = x.reshape(N, C_in, TV).astype(operand_dtype)

    # Batch blocking: NB elements per grid step (largest divisor of N that is
    # <= batch_block) to amortize per-grid-step overhead.
    NB = max(1, min(batch_block, N))
    while N % NB != 0:
        NB -= 1
    grid = (N // NB,)

    kernel = _make_tcn_kernel(NB, C_in, C_out, T, V, kt, pad, TVp)

    out_flat = pl.pallas_call(
        kernel,
        out_shape=jax.ShapeDtypeStruct((N, C_out, TVp), jnp.float32),
        grid_spec=pltpu.PrefetchScalarGridSpec(
            num_scalar_prefetch=0,
            grid=grid,
            in_specs=[
                pl.BlockSpec((NB, C_in, TV), lambda n: (n, 0, 0)),
                pl.BlockSpec((C_in, 1), lambda n: (0, 0)),
                pl.BlockSpec((C_in, 1), lambda n: (0, 0)),
                pl.BlockSpec((C_out, kt * C_in), lambda n: (0, 0)),
                pl.BlockSpec((C_out, 1), lambda n: (0, 0)),
            ],
            out_specs=pl.BlockSpec((NB, C_out, TVp), lambda n: (n, 0, 0)),
        ),
        compiler_params=pltpu.CompilerParams(
            dimension_semantics=("parallel",)),
    )(x_flat, s1c, t1c, w_eff, b_eff)

    out = out_flat if TVp == TV else out_flat[:, :, :TV]
    return out.reshape(N, C_out, T, V)


def tcn_block_reference(x, gamma1, beta1, mean1, var1, conv_w, conv_b,
                        gamma2, beta2, mean2, var2, *, stride=1, eps=1e-5):
    """Pure-JAX reference matching the PyTorch forward (eval mode)."""
    pad = (conv_w.shape[2] - 1) // 2
    h = (x - mean1[None, :, None, None]) / jnp.sqrt(
        var1[None, :, None, None] + eps) * gamma1[None, :, None, None] \
        + beta1[None, :, None, None]
    h = jax.nn.relu(h)
    y = jax.lax.conv_general_dilated(
        h, conv_w, window_strides=(stride, 1),
        padding=((pad, pad), (0, 0)),
        dimension_numbers=("NCHW", "OIHW", "NCHW"),
        precision=jax.lax.Precision.HIGHEST)
    y = y + conv_b[None, :, None, None]
    y = (y - mean2[None, :, None, None]) / jnp.sqrt(
        var2[None, :, None, None] + eps) * gamma2[None, :, None, None] \
        + beta2[None, :, None, None]
    # Dropout(p=0) -> identity; residual=False -> res = 0
    return jax.nn.relu(y)


if __name__ == "__main__":
    # Small shapes consistent with the module.
    N, C_in, C_out, T, V = 2, 4, 8, 16, 16
    kernel_size = 3   # temporal kernel size (must be odd)

    key = jax.random.PRNGKey(0)
    ks = jax.random.split(key, 11)

    x = jax.random.normal(ks[0], (N, C_in, T, V), dtype=jnp.float32)

    gamma1 = 1.0 + 0.1 * jax.random.normal(ks[1], (C_in,), dtype=jnp.float32)
    beta1 = 0.1 * jax.random.normal(ks[2], (C_in,), dtype=jnp.float32)
    mean1 = 0.1 * jax.random.normal(ks[3], (C_in,), dtype=jnp.float32)
    var1 = 1.0 + 0.2 * jax.random.uniform(ks[4], (C_in,), dtype=jnp.float32)

    conv_w = 0.1 * jax.random.normal(ks[5], (C_out, C_in, kernel_size, 1),
                                     dtype=jnp.float32)
    conv_b = 0.1 * jax.random.normal(ks[6], (C_out,), dtype=jnp.float32)

    gamma2 = 1.0 + 0.1 * jax.random.normal(ks[7], (C_out,), dtype=jnp.float32)
    beta2 = 0.1 * jax.random.normal(ks[8], (C_out,), dtype=jnp.float32)
    mean2 = 0.1 * jax.random.normal(ks[9], (C_out,), dtype=jnp.float32)
    var2 = 1.0 + 0.2 * jax.random.uniform(ks[10], (C_out,), dtype=jnp.float32)

    ref = tcn_block_reference(x, gamma1, beta1, mean1, var1, conv_w, conv_b,
                              gamma2, beta2, mean2, var2)
    ref = jax.block_until_ready(ref)

    # f32 operands: tight correctness check.
    out = tcn_block_forward(x, gamma1, beta1, mean1, var1, conv_w, conv_b,
                            gamma2, beta2, mean2, var2)
    out = jax.block_until_ready(out)
    assert out.shape == (N, C_out, T, V)
    np.testing.assert_allclose(np.asarray(out), np.asarray(ref),
                               rtol=1e-4, atol=1e-4)

    # bf16 MXU operands (v6e/v7x fast path): looser tolerance.
    out_bf16 = tcn_block_forward(x, gamma1, beta1, mean1, var1, conv_w, conv_b,
                                 gamma2, beta2, mean2, var2,
                                 operand_dtype=jnp.bfloat16)
    out_bf16 = jax.block_until_ready(out_bf16)
    np.testing.assert_allclose(np.asarray(out_bf16), np.asarray(ref),
                               rtol=2e-2, atol=2e-2)

    print("KERNEL_OK")
</pallas_src>

<mosaic_0001>
module attributes {stable_mosaic.version = 11 : i64} {
  func.func @kernel(%arg0: i32, %arg1: memref<2x4x256xf32, #tpu.memory_space<vmem>>, %arg2: memref<4x1xf32, #tpu.memory_space<vmem>>, %arg3: memref<4x1xf32, #tpu.memory_space<vmem>>, %arg4: memref<8x12xf32, #tpu.memory_space<vmem>>, %arg5: memref<8x1xf32, #tpu.memory_space<vmem>>, %arg6: memref<2x8x256xf32, #tpu.memory_space<vmem>>) attributes {dimension_semantics = [#tpu.dimension_semantics<parallel>], iteration_bounds = array<i64: 1>, scalar_prefetch = 0 : i64, scratch_operands = 0 : i64, tpu.core_type = #tpu.core_type<tc>, window_params = [{transform_indices = @transform_0, window_bounds = array<i64: 2, 4, 256>}, {pipeline_mode = #tpu.pipeline_mode<synchronous>, transform_indices = @transform_1, window_bounds = array<i64: 4, 1>}, {pipeline_mode = #tpu.pipeline_mode<synchronous>, transform_indices = @transform_2, window_bounds = array<i64: 4, 1>}, {pipeline_mode = #tpu.pipeline_mode<synchronous>, transform_indices = @transform_3, window_bounds = array<i64: 8, 12>}, {pipeline_mode = #tpu.pipeline_mode<synchronous>, transform_indices = @transform_4, window_bounds = array<i64: 8, 1>}, {transform_indices = @transform_5, window_bounds = array<i64: 2, 8, 256>}]} {
    %c0 = arith.constant 0 : index
    %c0_0 = arith.constant 0 : index
    %c0_1 = arith.constant 0 : index
    %0 = vector.load %arg1[%c0, %c0_0, %c0_1] : memref<2x4x256xf32, #tpu.memory_space<vmem>>, vector<2x4x256xf32>
    %c0_2 = arith.constant 0 : index
    %c0_3 = arith.constant 0 : index
    %1 = vector.load %arg2[%c0_2, %c0_3] : memref<4x1xf32, #tpu.memory_space<vmem>>, vector<4x1xf32>
    %2 = vector.shape_cast %1 : vector<4x1xf32> to vector<1x4x1xf32>
    %3 = vector.broadcast %2 : vector<1x4x1xf32> to vector<2x4x256xf32>
    %4 = arith.mulf %0, %3 : vector<2x4x256xf32>
    %c0_4 = arith.constant 0 : index
    %c0_5 = arith.constant 0 : index
    %5 = vector.load %arg3[%c0_4, %c0_5] : memref<4x1xf32, #tpu.memory_space<vmem>>, vector<4x1xf32>
    %6 = vector.shape_cast %5 : vector<4x1xf32> to vector<1x4x1xf32>
    %7 = vector.broadcast %6 : vector<1x4x1xf32> to vector<2x4x256xf32>
    %8 = arith.addf %4, %7 : vector<2x4x256xf32>
    %cst = arith.constant 0.000000e+00 : f32
    %9 = vector.broadcast %cst : f32 to vector<2x4x256xf32>
    %10 = arith.maximumf %8, %9 : vector<2x4x256xf32>
    %c0_6 = arith.constant 0 : index
    %c0_7 = arith.constant 0 : index
    %11 = vector.load %arg4[%c0_6, %c0_7] : memref<8x12xf32, #tpu.memory_space<vmem>>, vector<8x12xf32>
    %c0_8 = arith.constant 0 : index
    %c0_9 = arith.constant 0 : index
    %12 = vector.load %arg5[%c0_8, %c0_9] : memref<8x1xf32, #tpu.memory_space<vmem>>, vector<8x1xf32>
    %13 = vector.extract_strided_slice %10 {offsets = [0, 0, 0], sizes = [1, 4, 256], strides = [1, 1, 1]} : vector<2x4x256xf32> to vector<1x4x256xf32>
    %14 = vector.shape_cast %13 : vector<1x4x256xf32> to vector<4x256xf32>
    %cst_10 = arith.constant 0.000000e+00 : f32
    %15 = vector.broadcast %cst_10 : f32 to vector<4x16xf32>
    %16 = vector.extract_strided_slice %14 {offsets = [0, 0], sizes = [4, 240], strides = [1, 1]} : vector<4x256xf32> to vector<4x240xf32>
    %17 = tpu.concatenate %15, %16 in 1 : vector<4x16xf32>, vector<4x240xf32> -> vector<4x256xf32>
    %18 = vector.extract_strided_slice %14 {offsets = [0, 16], sizes = [4, 240], strides = [1, 1]} : vector<4x256xf32> to vector<4x240xf32>
    %cst_11 = arith.constant 0.000000e+00 : f32
    %19 = vector.broadcast %cst_11 : f32 to vector<4x16xf32>
    %20 = tpu.concatenate %18, %19 in 1 : vector<4x240xf32>, vector<4x16xf32> -> vector<4x256xf32>
    %21 = tpu.concatenate %17, %14, %20 in 0 : vector<4x256xf32>, vector<4x256xf32>, vector<4x256xf32> -> vector<12x256xf32>
    %cst_12 = arith.constant dense<0.000000e+00> : vector<8x256xf32>
    %22 = tpu.matmul %11, %21, %cst_12 {dimension_numbers = #tpu.dot_dimension_numbers<[1], [0], [0], [1], [0, 0, 1, 1], [], []>} : vector<8x12xf32>, vector<12x256xf32>, vector<8x256xf32> -> vector<8x256xf32>
    %23 = vector.broadcast %12 : vector<8x1xf32> to vector<8x256xf32>
    %24 = arith.addf %22, %23 : vector<8x256xf32>
    %cst_13 = arith.constant 0.000000e+00 : f32
    %25 = vector.broadcast %cst_13 : f32 to vector<8x256xf32>
    %26 = arith.maximumf %24, %25 : vector<8x256xf32>
    %c0_14 = arith.constant 0 : index
    %c0_15 = arith.constant 0 : index
    %c0_16 = arith.constant 0 : index
    %27 = vector.load %arg6[%c0_14, %c0_15, %c0_16] : memref<2x8x256xf32, #tpu.memory_space<vmem>>, vector<1x8x256xf32>
    %28 = vector.shape_cast %27 : vector<1x8x256xf32> to vector<8x256xf32>
    %29 = vector.shape_cast %26 : vector<8x256xf32> to vector<1x8x256xf32>
    tpu.vector_store %arg6[%c0_14, %c0_15, %c0_16], %29 {strides = array<i32>} : memref<2x8x256xf32, #tpu.memory_space<vmem>>, vector<1x8x256xf32>,
    %30 = vector.extract_strided_slice %10 {offsets = [1, 0, 0], sizes = [1, 4, 256], strides = [1, 1, 1]} : vector<2x4x256xf32> to vector<1x4x256xf32>
    %31 = vector.shape_cast %30 : vector<1x4x256xf32> to vector<4x256xf32>
    %cst_17 = arith.constant 0.000000e+00 : f32
    %32 = vector.broadcast %cst_17 : f32 to vector<4x16xf32>
    %33 = vector.extract_strided_slice %31 {offsets = [0, 0], sizes = [4, 240], strides = [1, 1]} : vector<4x256xf32> to vector<4x240xf32>
    %34 = tpu.concatenate %32, %33 in 1 : vector<4x16xf32>, vector<4x240xf32> -> vector<4x256xf32>
    %35 = vector.extract_strided_slice %31 {offsets = [0, 16], sizes = [4, 240], strides = [1, 1]} : vector<4x256xf32> to vector<4x240xf32>
    %cst_18 = arith.constant 0.000000e+00 : f32
    %36 = vector.broadcast %cst_18 : f32 to vector<4x16xf32>
    %37 = tpu.concatenate %35, %36 in 1 : vector<4x240xf32>, vector<4x16xf32> -> vector<4x256xf32>
    %38 = tpu.concatenate %34, %31, %37 in 0 : vector<4x256xf32>, vector<4x256xf32>, vector<4x256xf32> -> vector<12x256xf32>
    %cst_19 = arith.constant dense<0.000000e+00> : vector<8x256xf32>
    %39 = tpu.matmul %11, %38, %cst_19 {dimension_numbers = #tpu.dot_dimension_numbers<[1], [0], [0], [1], [0, 0, 1, 1], [], []>} : vector<8x12xf32>, vector<12x256xf32>, vector<8x256xf32> -> vector<8x256xf32>
    %40 = vector.broadcast %12 : vector<8x1xf32> to vector<8x256xf32>
    %41 = arith.addf %39, %40 : vector<8x256xf32>
    %cst_20 = arith.constant 0.000000e+00 : f32
    %42 = vector.broadcast %cst_20 : f32 to vector<8x256xf32>
    %43 = arith.maximumf %41, %42 : vector<8x256xf32>
    %c1 = arith.constant 1 : index
    %c0_21 = arith.constant 0 : index
    %c0_22 = arith.constant 0 : index
    %44 = vector.load %arg6[%c1, %c0_21, %c0_22] : memref<2x8x256xf32, #tpu.memory_space<vmem>>, vector<1x8x256xf32>
    %45 = vector.shape_cast %44 : vector<1x8x256xf32> to vector<8x256xf32>
    %46 = vector.shape_cast %43 : vector<8x256xf32> to vector<1x8x256xf32>
    tpu.vector_store %arg6[%c1, %c0_21, %c0_22], %46 {strides = array<i32>} : memref<2x8x256xf32, #tpu.memory_space<vmem>>, vector<1x8x256xf32>,
    return
  }
  func.func @transform_0(%arg0: i32) -> (i32, i32, i32) {
    %c0_i32 = arith.constant 0 : i32
    %c0_i32_0 = arith.constant 0 : i32
    %c0_i32_1 = arith.constant 0 : i32
    return %arg0, %c0_i32, %c0_i32_0 : i32, i32, i32
  }
  func.func @transform_1(%arg0: i32) -> (i32, i32) {
    %c0_i32 = arith.constant 0 : i32
    %c0_i32_0 = arith.constant 0 : i32
    %c0_i32_1 = arith.constant 0 : i32
    return %c0_i32, %c0_i32_0 : i32, i32
  }
  func.func @transform_2(%arg0: i32) -> (i32, i32) {
    %c0_i32 = arith.constant 0 : i32
    %c0_i32_0 = arith.constant 0 : i32
    %c0_i32_1 = arith.constant 0 : i32
    return %c0_i32, %c0_i32_0 : i32, i32
  }
  func.func @transform_3(%arg0: i32) -> (i32, i32) {
    %c0_i32 = arith.constant 0 : i32
    %c0_i32_0 = arith.constant 0 : i32
    %c0_i32_1 = arith.constant 0 : i32
    return %c0_i32, %c0_i32_0 : i32, i32
  }
  func.func @transform_4(%arg0: i32) -> (i32, i32) {
    %c0_i32 = arith.constant 0 : i32
    %c0_i32_0 = arith.constant 0 : i32
    %c0_i32_1 = arith.constant 0 : i32
    return %c0_i32, %c0_i32_0 : i32, i32
  }
  func.func @transform_5(%arg0: i32) -> (i32, i32, i32) {
    %c0_i32 = arith.constant 0 : i32
    %c0_i32_0 = arith.constant 0 : i32
    %c0_i32_1 = arith.constant 0 : i32
    return %arg0, %c0_i32, %c0_i32_0 : i32, i32, i32
  }
}

</mosaic_0001>

<llo_original>
// kernel: tpu_custom_call.1
$region0: #{tpu_custom_call.1}
  #allocation0 [shape = 'u32[]', space=smem, size = 0x4, offset = 0x4, fixed_abs, tag = 'smem constant byte address 0x4 - core index']
  #allocation1 [shape = 'u32[144,128]{1,0:T(1,128)}', space=vmem, size = 0x12000, scoped, tag = 'internal scratch']
  %s0 = inlined_call_operand.vmem [shape: f32[2,4,256], index: 0, kind: input, shape index: {}]
  %s1 = inlined_call_operand.vmem [shape: f32[4,1], index: 1, kind: input, shape index: {}]
  %s2 = inlined_call_operand.vmem [shape: f32[4,1], index: 2, kind: input, shape index: {}]
  %s3 = inlined_call_operand.vmem [shape: f32[8,12], index: 3, kind: input, shape index: {}]
  %s4 = inlined_call_operand.vmem [shape: f32[8,1], index: 4, kind: input, shape index: {}]
  %s5 = inlined_call_operand.hbm [shape: f32[2,8,256], index: 5, kind: output, shape index: {}]
  %s6 = sld [smem:[#allocation0]]
  $region30: #{tpu_custom_call.1} parent=0
    _
  %s8 = ssub.s32 1, %s6
  %s9 = scalar_select 0, %s8, %s6
  $region1: #{tpu_custom_call.1} parent=0
    #allocation2 [shape = 'u8[16384]{0}', space=vmem, size = 0x4000, scoped, tag = 'output window, operand 0, single buffered']
    #allocation3 [shape = 's32[1]{0}', space=sflag, size = 0x4, scoped, tag = 'scoped memory for tpu_custom_call.1']
    %10 = vsyncpa [#allocation3], 0
    // Predicated region
    $region2: #{tpu_custom_call.1} parent=1 // pred_check
      _
    $region3: #{tpu_custom_call.1} parent=1 // pred_check_branch
      %12 = sbr.rel (0) target = $region5
    $region4: #{tpu_custom_call.1} parent=1 // pred_region
      _
    $region5: #{tpu_custom_call.1} parent=1 // pred_fallthru
      _
    // Predicated region
    $region6: #{tpu_custom_call.1} parent=1 // pred_check
      _
    $region7: #{tpu_custom_call.1} parent=1 // pred_check_branch
      %14 = sbr.rel (0) target = $region9
    $region8: #{tpu_custom_call.1} parent=1 // pred_region
      _
    $region9: #{tpu_custom_call.1} parent=1 // pred_fallthru
      _
    // Predicated region
    $region10: #{tpu_custom_call.1} parent=1 // pred_check
      _
    $region11: #{tpu_custom_call.1} parent=1 // pred_check_branch
      %16 = sbr.rel (0) target = $region13
    $region12: #{tpu_custom_call.1} parent=1 // pred_region
      _
    $region13: #{tpu_custom_call.1} parent=1 // pred_fallthru
      _
    // Predicated region
    $region14: #{tpu_custom_call.1} parent=1 // pred_check
      _
    $region15: #{tpu_custom_call.1} parent=1 // pred_check_branch
      %18 = sbr.rel (0) target = $region17
    $region16: #{tpu_custom_call.1} parent=1 // pred_region
      _
    $region17: #{tpu_custom_call.1} parent=1 // pred_fallthru
      _
    // Predicated region
    $region18: #{tpu_custom_call.1} parent=1 // pred_check
      _
    $region19: #{tpu_custom_call.1} parent=1 // pred_check_branch
      %20 = sbr.rel (0) target = $region21
    $region20: #{tpu_custom_call.1} parent=1 // pred_region
      _
    $region21: #{tpu_custom_call.1} parent=1 // pred_fallthru
      _
    %v21 = vld [vmem:[%s0] sm:$0xff]
    %v22 = vld [vmem:[%s0 + $0x8] sm:$0xff]
    %v23 = vld [vmem:[%s1] sm:$0xf]
    %25 = vset.pattern.permute.xlu0 0
    %26 = vperm.xlu0 %25, %v23
    %v27 = vpop.permute.xlu0 %26
    %v29 = vunpack.c.l.s4 839922192
    %v30 = vunpack.c.0.s8 %v29
    %v31 = vlaneseq
    %v32 = vshrl.u32 %v31, 7
    %v33 = vsub.s32 %v30, %v32
    %v34 = vrot.slane %v27, %v33
    %v36 = vmul.f32 %v21, %v34
    %v37 = vmul.f32 %v22, %v34
    %v38 = vld [vmem:[%s2] sm:$0xf]
    %40 = vset.pattern.permute.xlu0 0
    %41 = vperm.xlu0 %40, %v38
    %v42 = vpop.permute.xlu0 %41
    %v44 = vunpack.c.l.s4 839922192
    %v45 = vunpack.c.0.s8 %v44
    %v46 = vlaneseq
    %v47 = vshrl.u32 %v46, 7
    %v48 = vsub.s32 %v45, %v47
    %v49 = vrot.slane %v42, %v48
    %v51 = vadd.f32 %v36, %v49
    %v52 = vadd.f32 %v37, %v49
    %v53 = vmax.f32 %v51, 0.0
    %v54 = vmax.f32 %v52, 0.0
    %v55 = vld [vmem:[%s3] sm:$0xff]
    %v56 = vld [vmem:[%s4] sm:$0xff]
    %v58 = vcombine.high %v53, %v53
    %59 = vrot.lane.b32.xlu0 %v53, 16
    %v60 = vpop.permute.xlu0 %59
    %61 = vrot.lane.b32.xlu0 %v58, 16
    %v62 = vpop.permute.xlu0 %61
    %vm63 = vcmask 130048
    %v64 = vsel %vm63, %v60, %v62
    %v67 = vsel %vm63, 0.0, %v60
    %68 = vrot.lane.b32.xlu0 %v53, 112
    %v69 = vpop.permute.xlu0 %68
    %70 = vrot.lane.b32.xlu0 %v58, 112
    %v71 = vpop.permute.xlu0 %70
    %vm72 = vcmask 916480
    %v73 = vsel %vm72, %v69, %v71
    %v75 = vsel %vm72, %v71, 0.0
    %v76 = vcombine.low %v53, %v53
    %vm78 = vcmask 1043456
    %v79 = vsel %vm78, %v67, %v76
    %v80 = vsel %vm78, %v64, %v53
    %82 = vset.pattern.permute.xlu0 0
    %83 = vperm.xlu0 %82, %v56
    %v84 = vpop.permute.xlu0 %83
    %vm86 = vcmask 97280
    %v88 = vsel %vm86, %v55, 0
    %v90 = vsel %vm78, %v73, 0
    %v93 = vsel %vm78, %v75, 0
    %95 = vmatprep.subr.mxu0 %v80
    %96 = vmatpush1.msra.mxu0 %v79
    %97 = vmatprep.subr.mxu0 %v93
    %98 = vmatpush1.msra.mxu0 %v90
    %99 = vmatprep.subr.mxu0 0.0
    %100 = vmatpush1.msra.mxu0 0.0
    %101 = vmatprep.subr.mxu0 0.0
    %102 = vmatpush1.msra.mxu0 0.0
    %103 = vmatprep.subr.mxu0 0.0
    %104 = vmatpush1.msra.mxu0 0.0
    %105 = vmatprep.subr.mxu0 0.0
    %106 = vmatpush1.msra.mxu0 0.0
    %107 = vmatprep.subr.mxu0 0.0
    %108 = vmatpush1.msra.mxu0 0.0
    %109 = vmatprep.subr.mxu0 0.0
    %110 = vmatpush1.msra.mxu0 0.0
    %111 = vmatprep.subr.mxu0 0.0
    %112 = vmatpush1.msra.mxu0 0.0
    %113 = vmatprep.subr.mxu0 0.0
    %114 = vmatpush1.msra.mxu0 0.0
    %115 = vmatprep.subr.mxu0 0.0
    %116 = vmatpush1.msra.mxu0 0.0
    %117 = vmatprep.subr.mxu0 0.0
    %118 = vmatpush1.msra.mxu0 0.0
    %119 = vmatprep.subr.mxu0 0.0
    %120 = vmatpush1.msra.mxu0 0.0
    %121 = vmatprep.subr.mxu0 0.0
    %122 = vmatpush1.msra.mxu0 0.0
    %123 = vmatprep.subr.mxu0 0.0
    %124 = vmatpush1.msra.mxu0 0.0
    %125 = vmatprep.subr.mxu0 0.0
    %126 = vmatpush1.msra.mxu0 0.0
    %127 = vmatprep.subr.mxu0 0.0
    %128 = vmatpush1.msra.mxu0 0.0
    %129 = vmatprep.subr.mxu0 0.0
    %130 = vmatpush1.msra.mxu0 0.0
    %131 = vmatprep.subr.mxu0 0.0
    %132 = vmatpush1.msra.mxu0 0.0
    %133 = vmatprep.subr.mxu0 0.0
    %134 = vmatpush1.msra.mxu0 0.0
    %135 = vmatprep.subr.mxu0 0.0
    %136 = vmatpush1.msra.mxu0 0.0
    %137 = vmatprep.subr.mxu0 0.0
    %138 = vmatpush1.msra.mxu0 0.0
    %139 = vmatprep.subr.mxu0 0.0
    %140 = vmatpush1.msra.mxu0 0.0
    %141 = vmatprep.subr.mxu0 0.0
    %142 = vmatpush1.msra.mxu0 0.0
    %143 = vmatprep.subr.mxu0 0.0
    %144 = vmatpush1.msra.mxu0 0.0
    %145 = vmatprep.subr.mxu0 0.0
    %146 = vmatpush1.msra.mxu0 0.0
    %147 = vmatprep.subr.mxu0 0.0
    %148 = vmatpush1.msra.mxu0 0.0
    %149 = vmatprep.subr.mxu0 0.0
    %150 = vmatpush1.msra.mxu0 0.0
    %151 = vmatprep.subr.mxu0 0.0
    %152 = vmatpush1.msra.mxu0 0.0
    %153 = vmatprep.subr.mxu0 0.0
    %154 = vmatpush1.msra.mxu0 0.0
    %155 = vmatprep.subr.mxu0 0.0
    %156 = vmatpush1.msra.mxu0 0.0
    %157 = vmatprep.subr.mxu0 0.0
    %158 = vmatpush1.msra.mxu0 0.0
    %159 = vmatprep.mubr.f32.mxu0 0.0
    %160 = vmatmul.mubr.f32.gmra.mrb[0].mxu0 %v88
    %v161 = vpop.f32.mrb[0].mxu0
    %v162 = vadd.f32 %v84, %v161
    %v163 = vpop.f32.mrb[0].mxu0
    %v164 = vadd.f32 %v84, %v163
    %165 = vdwg.mxu0
    %v166 = vmax.f32 %v162, 0.0
    %v167 = vmax.f32 %v164, 0.0
    %168 = vst [vmem:[#allocation2] sm:$0xff] %v166
    %169 = vst [vmem:[#allocation2 + $0x8] sm:$0xff] %v167
    %v171 = vcombine.high %v54, %v54
    %172 = vrot.lane.b32.xlu0 %v54, 16
    %v173 = vpop.permute.xlu0 %172
    %174 = vrot.lane.b32.xlu0 %v171, 16
    %v175 = vpop.permute.xlu0 %174
    %v176 = vsel %vm63, %v173, %v175
    %v179 = vsel %vm63, 0.0, %v173
    %180 = vrot.lane.b32.xlu0 %v54, 112
    %v181 = vpop.permute.xlu0 %180
    %182 = vrot.lane.b32.xlu0 %v171, 112
    %v183 = vpop.permute.xlu0 %182
    %v184 = vsel %vm72, %v181, %v183
    %v186 = vsel %vm72, %v183, 0.0
    %v187 = vcombine.low %v54, %v54
    %v189 = vsel %vm78, %v179, %v187
    %v190 = vsel %vm78, %v176, %v54
    %v191 = vsel %vm78, %v184, 0
    %v194 = vsel %vm78, %v186, 0
    %196 = vmatprep.subr.mxu0 %v190
    %197 = vmatpush1.msra.mxu0 %v189
    %198 = vmatprep.subr.mxu0 %v194
    %199 = vmatpush1.msra.mxu0 %v191
    %200 = vmatprep.subr.mxu0 0.0
    %201 = vmatpush1.msra.mxu0 0.0
    %202 = vmatprep.subr.mxu0 0.0
    %203 = vmatpush1.msra.mxu0 0.0
    %204 = vmatprep.subr.mxu0 0.0
    %205 = vmatpush1.msra.mxu0 0.0
    %206 = vmatprep.subr.mxu0 0.0
    %207 = vmatpush1.msra.mxu0 0.0
    %208 = vmatprep.subr.mxu0 0.0
    %209 = vmatpush1.msra.mxu0 0.0
    %210 = vmatprep.subr.mxu0 0.0
    %211 = vmatpush1.msra.mxu0 0.0
    %212 = vmatprep.subr.mxu0 0.0
    %213 = vmatpush1.msra.mxu0 0.0
    %214 = vmatprep.subr.mxu0 0.0
    %215 = vmatpush1.msra.mxu0 0.0
    %216 = vmatprep.subr.mxu0 0.0
    %217 = vmatpush1.msra.mxu0 0.0
    %218 = vmatprep.subr.mxu0 0.0
    %219 = vmatpush1.msra.mxu0 0.0
    %220 = vmatprep.subr.mxu0 0.0
    %221 = vmatpush1.msra.mxu0 0.0
    %222 = vmatprep.subr.mxu0 0.0
    %223 = vmatpush1.msra.mxu0 0.0
    %224 = vmatprep.subr.mxu0 0.0
    %225 = vmatpush1.msra.mxu0 0.0
    %226 = vmatprep.subr.mxu0 0.0
    %227 = vmatpush1.msra.mxu0 0.0
    %228 = vmatprep.subr.mxu0 0.0
    %229 = vmatpush1.msra.mxu0 0.0
    %230 = vmatprep.subr.mxu0 0.0
    %231 = vmatpush1.msra.mxu0 0.0
    %232 = vmatprep.subr.mxu0 0.0
    %233 = vmatpush1.msra.mxu0 0.0
    %234 = vmatprep.subr.mxu0 0.0
    %235 = vmatpush1.msra.mxu0 0.0
    %236 = vmatprep.subr.mxu0 0.0
    %237 = vmatpush1.msra.mxu0 0.0
    %238 = vmatprep.subr.mxu0 0.0
    %239 = vmatpush1.msra.mxu0 0.0
    %240 = vmatprep.subr.mxu0 0.0
    %241 = vmatpush1.msra.mxu0 0.0
    %242 = vmatprep.subr.mxu0 0.0
    %243 = vmatpush1.msra.mxu0 0.0
    %244 = vmatprep.subr.mxu0 0.0
    %245 = vmatpush1.msra.mxu0 0.0
    %246 = vmatprep.subr.mxu0 0.0
    %247 = vmatpush1.msra.mxu0 0.0
    %248 = vmatprep.subr.mxu0 0.0
    %249 = vmatpush1.msra.mxu0 0.0
    %250 = vmatprep.subr.mxu0 0.0
    %251 = vmatpush1.msra.mxu0 0.0
    %252 = vmatprep.subr.mxu0 0.0
    %253 = vmatpush1.msra.mxu0 0.0
    %254 = vmatprep.subr.mxu0 0.0
    %255 = vmatpush1.msra.mxu0 0.0
    %256 = vmatprep.subr.mxu0 0.0
    %257 = vmatpush1.msra.mxu0 0.0
    %258 = vmatprep.subr.mxu0 0.0
    %259 = vmatpush1.msra.mxu0 0.0
    %260 = vmatprep.mubr.f32.mxu0 0.0
    %261 = vmatmul.mubr.f32.gmra.mrb[0].mxu0 %v88
    %v262 = vpop.f32.mrb[0].mxu0
    %v263 = vadd.f32 %v84, %v262
    %v264 = vpop.f32.mrb[0].mxu0
    %v265 = vadd.f32 %v84, %v264
    %266 = vdwg.mxu0
    %v267 = vmax.f32 %v263, 0.0
    %v268 = vmax.f32 %v265, 0.0
    %s269 = scalar_lea.vmem [#allocation2], 16
    %270 = vst [vmem:[%s269] sm:$0xff] %v267
    %271 = vst [vmem:[%s269 + $0x8] sm:$0xff] %v268
    // Predicated region
    $region22: #{tpu_custom_call.1} parent=1 // pred_check
      _
    $region23: #{tpu_custom_call.1} parent=1 // pred_check_branch
      %273 = sbr.rel (0) target = $region25
    $region24: #{tpu_custom_call.1} parent=1 // pred_region
      %s275 = ssub.s32 512, 512
      %276 = vsyncadd [#allocation3], %s275
      %s277 = sshll.u32 [#allocation2], 4
      %s278 = int_to_ptr.vmem [resolvable:$true] %s277
      %283 = dma.vmem_to_hbm [thread:$0]  %s278, 512, %s5, [#allocation3], 256, 256, 16
    $region25: #{tpu_custom_call.1} parent=1 // pred_fallthru
      _
    // Predicated region
    $region26: #{tpu_custom_call.1} parent=1 // pred_check
      _
    $region27: #{tpu_custom_call.1} parent=1 // pred_check_branch
      %285 = sbr.rel (0) target = $region29
    $region28: #{tpu_custom_call.1} parent=1 // pred_region
      %286 = dma.done [#allocation3], 512
    $region29: #{tpu_custom_call.1} parent=1 // pred_fallthru
      _
    %287 = vsyncpa [#allocation3], 1

</llo_original>
